<compile_context>
chip_gen: v7x
topology: tpu7x:2x2x1
jax: 0.10.0
libtpu: 0.0.40
codegen_flags: <defaults>
</compile_context>

<pallas_src>
import jax
import jax.numpy as jnp
from jax.experimental import pallas as pl
from jax.experimental.pallas import tpu as pltpu


def _round_up(x, m):
    return ((x + m - 1) // m) * m


def _deeppose_head_kernel(feat_ref, w_ref, b_ref, out_ref):
    # feat_ref: (TB, TC, HW)  backbone features, native dtype (bf16/f32)
    # w_ref:    (TC, J2P)     fc_coord weight^T, 1/HW folded in, lane-padded (f32)
    # b_ref:    (1, J2P)      fc_coord bias, lane-padded (f32)
    # out_ref:  (TB, J2P)     f32 output block, resident across the channel axis
    k = pl.program_id(1)

    @pl.when(k == 0)
    def _():
        # Initialize the resident output block with the bias; the per-channel-
        # tile contributions below accumulate straight into it (no scratch).
        out_ref[...] = jnp.broadcast_to(b_ref[...], out_ref.shape)

    # AdaptiveAvgPool2d(1) == mean over HW; the 1/HW scale is folded into the
    # weight so a plain sum suffices (f32 accumulation regardless of feat
    # dtype). The kernel is HBM-bandwidth bound (huge feature read feeding a
    # tiny matmul), so this fused upcast+reduce is hidden under the feature
    # DMA; an MXU ones-matmul pooling would still need a sublane->lane
    # relayout of the pooled (TB, TC) tile before the fc matmul, so it buys
    # nothing at the roofline.
    pooled = jnp.sum(feat_ref[...], axis=-1, dtype=jnp.float32)       # (TB, TC)
    out_ref[...] += jnp.dot(pooled, w_ref[...],
                            preferred_element_type=jnp.float32)


def _pick_tiles(B, C, HW, itemsize):
    """Pick (TB, TC) so that:
      * blocks obey the (8,128) rule (divisible or full-dim),
      * the *padded*, double-buffered feat block stays well inside v7x's
        64 MiB VMEM while leaving several reduction steps for pipelining,
      * the batch (parallel) axis has >= 2 steps when B >= 16 so the second
        TensorCore on v7x megacore is not idle.
    Padded sizes: second-minor dim rounds to the sublane pack (16 for bf16,
    8 for f32); last dim rounds to 128 lanes.
    """
    sub = 16 if itemsize == 2 else 8
    hw_pad = _round_up(HW, 128)

    # Batch tile.
    if B <= 8:
        tb = B
    else:
        cands = [d for d in range(8, B, 8) if B % d == 0]
        if cands:
            le_half = [d for d in cands if d <= B // 2]
            tb = max(le_half) if le_half else min(cands)
        else:
            tb = B  # no legal multiple-of-8 split of B -> single batch tile

    # Channel tile: target ~3 MiB of *padded* feat per buffer (~6 MiB double-
    # buffered), which keeps >= ~4 reduction steps at production shapes and
    # fits every generation's VMEM with large margin.
    budget = 3 * 1024 * 1024
    row_bytes = tb * hw_pad * itemsize
    tc_cap = max(sub, budget // max(1, row_bytes))
    tc = C
    for t in range(min(C, tc_cap), 0, -1):
        if C % t == 0 and (t % sub == 0 or t == C):
            tc = t
            break
    return tb, tc


def deeppose_head(feat_nchw, w, b, num_joints):
    """DeepPose head. feat_nchw: (B, C, H, W); w: (C, 2J); b: (2J,) -> (B, J, 2)."""
    B, C, H, W = feat_nchw.shape
    HW = H * W
    J2 = 2 * num_joints
    J2p = _round_up(J2, 128)           # lane-dense weight/output (unmasked vst)

    # Flattening NCHW contiguous dims is free; no wrapper transpose (would
    # re-read/write the whole feature map in HBM).
    feat = feat_nchw.reshape(B, C, HW)

    # Fold the 1/HW pooling scale into the weight; pad weight/bias to 128 lanes.
    w_scaled = w.astype(jnp.float32) * (1.0 / float(HW))
    w_p = jnp.zeros((C, J2p), jnp.float32).at[:, :J2].set(w_scaled)
    b_p = jnp.zeros((1, J2p), jnp.float32).at[0, :J2].set(b.astype(jnp.float32))

    itemsize = feat.dtype.itemsize
    tb, tc = _pick_tiles(B, C, HW, itemsize)
    grid = (B // tb, C // tc)          # channel (reduction) axis last = innermost

    # VMEM accounting with *padded* tile shapes (sublane pack + 128-lane pad).
    sub = 16 if itemsize == 2 else 8
    feat_blk = tb * _round_up(tc, sub) * _round_up(HW, 128) * itemsize
    w_blk = _round_up(tc, 8) * J2p * 4
    b_blk = 8 * J2p * 4
    out_blk = _round_up(tb, 8) * J2p * 4
    vmem_need = 2 * (feat_blk + w_blk + b_blk + out_blk)   # double-buffered
    # Cap below v7x's 64 MiB physical VMEM per TensorCore (also safe on v5e/v6e).
    vmem_limit = min(int(vmem_need * 1.25) + (2 << 20), 56 * (1 << 20))

    cost = pl.CostEstimate(
        flops=2 * B * C * J2p + B * C * HW,
        transcendentals=0,
        bytes_accessed=(feat.size * itemsize + w_p.size * 4 + b_p.size * 4
                        + B * J2p * 4),
    )

    out_full = pl.pallas_call(
        _deeppose_head_kernel,
        out_shape=jax.ShapeDtypeStruct((B, J2p), jnp.float32),
        grid_spec=pltpu.PrefetchScalarGridSpec(
            num_scalar_prefetch=0,
            grid=grid,
            in_specs=[
                pl.BlockSpec((tb, tc, HW), lambda i, k: (i, k, 0)),
                pl.BlockSpec((tc, J2p), lambda i, k: (k, 0)),   # refetched per C block
                pl.BlockSpec((1, J2p), lambda i, k: (0, 0)),    # bias fetched once
            ],
            out_specs=pl.BlockSpec((tb, J2p), lambda i, k: (i, 0)),
        ),
        compiler_params=pltpu.CompilerParams(
            # Batch tiles are independent -> megacore-shardable on v7x; the
            # channel axis is the reduction and stays innermost/arbitrary.
            dimension_semantics=("parallel", "arbitrary"),
            vmem_limit_bytes=vmem_limit,
        ),
        cost_estimate=cost,
    )(feat, w_p, b_p)

    return out_full[:, :J2].reshape(B, num_joints, 2)


if __name__ == "__main__":
    # Small, deterministic synthetic shapes consistent with the module's head:
    # backbone feature map (B, feature_channel, h, w), num_joints joints.
    B, C, H, W = 2, 64, 8, 8
    NUM_JOINTS = 8

    key = jax.random.PRNGKey(0)
    k_feat, k_w, k_b = jax.random.split(key, 3)

    # Keep the feature map in bf16 (backbone dtype) — halves the HBM traffic.
    feat = jax.random.normal(k_feat, (B, C, H, W), dtype=jnp.float32).astype(jnp.bfloat16)
    # fc_coord: nn.Linear(feature_channel, num_joints * 2).
    # PyTorch stores weight as (2J, C); we keep the transposed (C, 2J) layout.
    w = jax.random.normal(k_w, (C, NUM_JOINTS * 2), dtype=jnp.float32) * 0.02
    b = jax.random.normal(k_b, (NUM_JOINTS * 2,), dtype=jnp.float32) * 0.01

    out = deeppose_head(feat, w, b, NUM_JOINTS)
    out = jax.block_until_ready(out)

    # Pure-JAX reference of the head semantics (same bf16 inputs, f32 compute).
    feat_f32 = feat.astype(jnp.float32).reshape(B, C, -1)
    pooled_ref = jnp.mean(feat_f32, axis=-1)
    ref = (pooled_ref @ w + b).reshape(B, NUM_JOINTS, 2)

    assert out.shape == (B, NUM_JOINTS, 2)
    assert jnp.allclose(out, ref, atol=1e-4, rtol=1e-4)

    print("KERNEL_OK")
</pallas_src>

<mosaic_0001>
module attributes {stable_mosaic.version = 11 : i64} {
  func.func @_deeppose_head_kernel(%arg0: i32, %arg1: i32, %arg2: memref<2x64x64xbf16, #tpu.memory_space<vmem>>, %arg3: memref<64x128xf32, #tpu.memory_space<vmem>>, %arg4: memref<1x128xf32, #tpu.memory_space<vmem>>, %arg5: memref<2x128xf32, #tpu.memory_space<vmem>>) attributes {dimension_semantics = [#tpu.dimension_semantics<parallel>, #tpu.dimension_semantics<arbitrary>], iteration_bounds = array<i64: 1, 1>, scalar_prefetch = 0 : i64, scratch_operands = 0 : i64, tpu.core_type = #tpu.core_type<tc>, window_params = [{transform_indices = @transform_0, window_bounds = array<i64: 2, 64, 64>}, {transform_indices = @transform_1, window_bounds = array<i64: 64, 128>}, {pipeline_mode = #tpu.pipeline_mode<synchronous>, transform_indices = @transform_2, window_bounds = array<i64: 1, 128>}, {transform_indices = @transform_3, window_bounds = array<i64: 2, 128>}]} {
    %c0_i32 = arith.constant 0 : i32
    %0 = arith.cmpi eq, %arg1, %c0_i32 : i32
    %1 = arith.extui %0 : i1 to i32
    %c0_i32_0 = arith.constant 0 : i32
    %2 = arith.cmpi ne, %1, %c0_i32_0 : i32
    scf.if %2 {
      %c0_10 = arith.constant 0 : index
      %c0_11 = arith.constant 0 : index
      %11 = vector.load %arg4[%c0_10, %c0_11] : memref<1x128xf32, #tpu.memory_space<vmem>>, vector<1x128xf32>
      %12 = vector.shape_cast %11 : vector<1x128xf32> to vector<1x128xf32>
      %13 = vector.broadcast %12 : vector<1x128xf32> to vector<2x128xf32>
      %c0_12 = arith.constant 0 : index
      %c0_13 = arith.constant 0 : index
      %14 = vector.load %arg5[%c0_12, %c0_13] : memref<2x128xf32, #tpu.memory_space<vmem>>, vector<2x128xf32>
      tpu.vector_store %arg5[%c0_12, %c0_13], %13 {strides = array<i32>} : memref<2x128xf32, #tpu.memory_space<vmem>>, vector<2x128xf32>,
    } else {
    }
    %c0 = arith.constant 0 : index
    %c0_1 = arith.constant 0 : index
    %c0_2 = arith.constant 0 : index
    %3 = vector.load %arg2[%c0, %c0_1, %c0_2] : memref<2x64x64xbf16, #tpu.memory_space<vmem>>, vector<2x64x64xbf16>
    %4 = arith.extf %3 : vector<2x64x64xbf16> to vector<2x64x64xf32>
    %cst = arith.constant dense<0.000000e+00> : vector<2x64xf32>
    %5 = vector.multi_reduction <add>, %4, %cst [2] : vector<2x64x64xf32> to vector<2x64xf32>
    %c0_3 = arith.constant 0 : index
    %c0_4 = arith.constant 0 : index
    %6 = vector.load %arg5[%c0_3, %c0_4] : memref<2x128xf32, #tpu.memory_space<vmem>>, vector<2x128xf32>
    %c0_5 = arith.constant 0 : index
    %c0_6 = arith.constant 0 : index
    %7 = vector.load %arg3[%c0_5, %c0_6] : memref<64x128xf32, #tpu.memory_space<vmem>>, vector<64x128xf32>
    %cst_7 = arith.constant dense<0.000000e+00> : vector<2x128xf32>
    %8 = tpu.matmul %5, %7, %cst_7 {dimension_numbers = #tpu.dot_dimension_numbers<[1], [0], [0], [1], [0, 0, 1, 1], [], []>} : vector<2x64xf32>, vector<64x128xf32>, vector<2x128xf32> -> vector<2x128xf32>
    %9 = arith.addf %6, %8 : vector<2x128xf32>
    %c0_8 = arith.constant 0 : index
    %c0_9 = arith.constant 0 : index
    %10 = vector.load %arg5[%c0_8, %c0_9] : memref<2x128xf32, #tpu.memory_space<vmem>>, vector<2x128xf32>
    tpu.vector_store %arg5[%c0_8, %c0_9], %9 {strides = array<i32>} : memref<2x128xf32, #tpu.memory_space<vmem>>, vector<2x128xf32>,
    return
  }
  func.func @transform_0(%arg0: i32, %arg1: i32) -> (i32, i32, i32) {
    %c0_i32 = arith.constant 0 : i32
    %c0_i32_0 = arith.constant 0 : i32
    return %arg0, %arg1, %c0_i32 : i32, i32, i32
  }
  func.func @transform_1(%arg0: i32, %arg1: i32) -> (i32, i32) {
    %c0_i32 = arith.constant 0 : i32
    %c0_i32_0 = arith.constant 0 : i32
    return %arg1, %c0_i32 : i32, i32
  }
  func.func @transform_2(%arg0: i32, %arg1: i32) -> (i32, i32) {
    %c0_i32 = arith.constant 0 : i32
    %c0_i32_0 = arith.constant 0 : i32
    %c0_i32_1 = arith.constant 0 : i32
    return %c0_i32, %c0_i32_0 : i32, i32
  }
  func.func @transform_3(%arg0: i32, %arg1: i32) -> (i32, i32) {
    %c0_i32 = arith.constant 0 : i32
    %c0_i32_0 = arith.constant 0 : i32
    return %arg0, %c0_i32 : i32, i32
  }
}

</mosaic_0001>

<llo_original>
// kernel: tpu_custom_call.1
$region0: #{tpu_custom_call.1}
  #allocation0 [shape = 'u32[]', space=smem, size = 0x4, offset = 0x4, fixed_abs, tag = 'smem constant byte address 0x4 - core index']
  #allocation1 [shape = 'u32[144,128]{1,0:T(1,128)}', space=vmem, size = 0x12000, scoped, tag = 'internal scratch']
  %s0 = inlined_call_operand.hbm [shape: bf16[2,64,64], index: 0, kind: input, shape index: {}]
  %s1 = inlined_call_operand.hbm [shape: f32[64,128], index: 1, kind: input, shape index: {}]
  %s2 = inlined_call_operand.vmem [shape: f32[1,128], index: 2, kind: input, shape index: {}]
  %s3 = inlined_call_operand.hbm [shape: f32[2,128], index: 3, kind: output, shape index: {}]
  %s4 = sld [smem:[#allocation0]]
  $region34: #{tpu_custom_call.1} parent=0
    _
  %s6 = ssub.s32 1, %s4
  %s7 = scalar_select 0, %s6, %s4
  $region1: #{tpu_custom_call.1} parent=0
    #allocation2 [shape = 'u8[32768]{0}', space=vmem, size = 0x8000, scoped, tag = 'input window, operand 0, single buffered']
    #allocation3 [shape = 's32[1]{0}', space=sflag, size = 0x4, scoped, tag = 'scoped memory for tpu_custom_call.1']
    #allocation4 [shape = 's32[1]{0}', space=sflag, size = 0x4, scoped, tag = 'scoped memory for tpu_custom_call.1']
    #allocation5 [shape = 'u8[32768]{0}', space=vmem, size = 0x8000, scoped, tag = 'input window, operand 1, single buffered']
    #allocation6 [shape = 's32[1]{0}', space=sflag, size = 0x4, scoped, tag = 'scoped memory for tpu_custom_call.1']
    #allocation7 [shape = 'u8[1024]{0}', space=vmem, size = 0x400, scoped, tag = 'output window, operand 0, single buffered']
    %8 = vsyncpa [#allocation3], 0
    %9 = vsyncpa [#allocation6], 0
    %10 = vsyncpa [#allocation4], 0
    // Predicated region
    $region2: #{tpu_custom_call.1} parent=1 // pred_check
      _
    $region3: #{tpu_custom_call.1} parent=1 // pred_check_branch
      %12 = sbr.rel (0) target = $region5
    $region4: #{tpu_custom_call.1} parent=1 // pred_region
      %s14 = ssub.s32 1024, 1024
      %15 = vsyncadd [#allocation3], %s14
      %s16 = sshll.u32 [#allocation2], 4
      %s17 = int_to_ptr.vmem [resolvable:$true] %s16
      %22 = dma.hbm_to_vmem [thread:$0]  %s0, 1024, %s17, [#allocation3], 64, 64, 4
    $region5: #{tpu_custom_call.1} parent=1 // pred_fallthru
      _
    // Predicated region
    $region6: #{tpu_custom_call.1} parent=1 // pred_check
      _
    $region7: #{tpu_custom_call.1} parent=1 // pred_check_branch
      %24 = sbr.rel (0) target = $region9
    $region8: #{tpu_custom_call.1} parent=1 // pred_region
      %s26 = ssub.s32 1024, 1024
      %27 = vsyncadd [#allocation6], %s26
      %s28 = sshll.u32 [#allocation5], 4
      %s29 = int_to_ptr.vmem [resolvable:$true] %s28
      %34 = dma.hbm_to_vmem [thread:$0]  %s1, 1024, %s29, [#allocation6], 128, 128, 8
    $region9: #{tpu_custom_call.1} parent=1 // pred_fallthru
      _
    // Predicated region
    $region10: #{tpu_custom_call.1} parent=1 // pred_check
      _
    $region11: #{tpu_custom_call.1} parent=1 // pred_check_branch
      %36 = sbr.rel (0) target = $region13
    $region12: #{tpu_custom_call.1} parent=1 // pred_region
      _
    $region13: #{tpu_custom_call.1} parent=1 // pred_fallthru
      _
    // Predicated region
    $region14: #{tpu_custom_call.1} parent=1 // pred_check
      _
    $region15: #{tpu_custom_call.1} parent=1 // pred_check_branch
      %38 = sbr.rel (0) target = $region17
    $region16: #{tpu_custom_call.1} parent=1 // pred_region
      %39 = dma.done [#allocation3], 1024
    $region17: #{tpu_custom_call.1} parent=1 // pred_fallthru
      _
    // Predicated region
    $region18: #{tpu_custom_call.1} parent=1 // pred_check
      _
    $region19: #{tpu_custom_call.1} parent=1 // pred_check_branch
      %41 = sbr.rel (0) target = $region21
    $region20: #{tpu_custom_call.1} parent=1 // pred_region
      %42 = dma.done [#allocation6], 1024
    $region21: #{tpu_custom_call.1} parent=1 // pred_fallthru
      _
    %p43 = scmp.eq.s32.totalorder 0, 0
    // Predicated region
    $region22: #{tpu_custom_call.1} parent=1 // pred_check
      %p44 = pneg %p43
    $region23: #{tpu_custom_call.1} parent=1 // pred_check_branch
      %46 = sbr.rel (%p44) target = $region25
    $region24: #{tpu_custom_call.1} parent=1 // pred_region
      %v47 = vld [vmem:[%s2] sm:$0x1]
      %v49 = vlaneseq
      %v50 = vshrl.u32 %v49, 7
      %v51 = vsub.s32 0, %v50
      %v52 = vrot.slane %v47, %v51
      %54 = vst [vmem:[#allocation7] sm:$0x3] %v52
    $region25: #{tpu_custom_call.1} parent=1 // pred_fallthru
      _
    %v55 = vld [vmem:[#allocation2] sm:$0xf]
    %v56 = vld [vmem:[#allocation2 + $0x4] sm:$0xf]
    %v57 = vld [vmem:[#allocation2 + $0x8] sm:$0xf]
    %v58 = vld [vmem:[#allocation2 + $0xc] sm:$0xf]
    %v59 = vld [vmem:[#allocation2 + $0x10] sm:$0xf]
    %v60 = vld [vmem:[#allocation2 + $0x14] sm:$0xf]
    %v61 = vld [vmem:[#allocation2 + $0x18] sm:$0xf]
    %v62 = vld [vmem:[#allocation2 + $0x1c] sm:$0xf]
    %v63 = vld [vmem:[#allocation2 + $0x20] sm:$0xf]
    %v64 = vld [vmem:[#allocation2 + $0x24] sm:$0xf]
    %v65 = vld [vmem:[#allocation2 + $0x28] sm:$0xf]
    %v66 = vld [vmem:[#allocation2 + $0x2c] sm:$0xf]
    %v67 = vld [vmem:[#allocation2 + $0x30] sm:$0xf]
    %v68 = vld [vmem:[#allocation2 + $0x34] sm:$0xf]
    %v69 = vld [vmem:[#allocation2 + $0x38] sm:$0xf]
    %v70 = vld [vmem:[#allocation2 + $0x3c] sm:$0xf]
    %v71 = vunpack.c.l.bf16 %v55
    %v72 = vunpack.c.l.bf16 %v56
    %v73 = vunpack.c.l.bf16 %v57
    %v74 = vunpack.c.l.bf16 %v58
    %v75 = vunpack.c.l.bf16 %v59
    %v76 = vunpack.c.l.bf16 %v60
    %v77 = vunpack.c.l.bf16 %v61
    %v78 = vunpack.c.l.bf16 %v62
    %v79 = vunpack.c.l.bf16 %v63
    %v80 = vunpack.c.l.bf16 %v64
    %v81 = vunpack.c.l.bf16 %v65
    %v82 = vunpack.c.l.bf16 %v66
    %v83 = vunpack.c.l.bf16 %v67
    %v84 = vunpack.c.l.bf16 %v68
    %v85 = vunpack.c.l.bf16 %v69
    %v86 = vunpack.c.l.bf16 %v70
    %vm87 = vcmask 523264
    %v88 = vsel %vm87, %v71, 0.0
    %89 = vadd.xlane.f32.xlu0 %v88
    %v90 = vpop.xlane.xlu0 %89
    %v91 = vsel %vm87, %v72, 0.0
    %92 = vadd.xlane.f32.xlu0 %v91
    %v93 = vpop.xlane.xlu0 %92
    %v94 = vsel %vm87, %v73, 0.0
    %95 = vadd.xlane.f32.xlu0 %v94
    %v96 = vpop.xlane.xlu0 %95
    %v97 = vsel %vm87, %v74, 0.0
    %98 = vadd.xlane.f32.xlu0 %v97
    %v99 = vpop.xlane.xlu0 %98
    %v100 = vsel %vm87, %v75, 0.0
    %101 = vadd.xlane.f32.xlu0 %v100
    %v102 = vpop.xlane.xlu0 %101
    %v103 = vsel %vm87, %v76, 0.0
    %104 = vadd.xlane.f32.xlu0 %v103
    %v105 = vpop.xlane.xlu0 %104
    %v106 = vsel %vm87, %v77, 0.0
    %107 = vadd.xlane.f32.xlu0 %v106
    %v108 = vpop.xlane.xlu0 %107
    %v109 = vsel %vm87, %v78, 0.0
    %110 = vadd.xlane.f32.xlu0 %v109
    %v111 = vpop.xlane.xlu0 %110
    %v112 = vsel %vm87, %v79, 0.0
    %113 = vadd.xlane.f32.xlu0 %v112
    %v114 = vpop.xlane.xlu0 %113
    %v115 = vsel %vm87, %v80, 0.0
    %116 = vadd.xlane.f32.xlu0 %v115
    %v117 = vpop.xlane.xlu0 %116
    %v118 = vsel %vm87, %v81, 0.0
    %119 = vadd.xlane.f32.xlu0 %v118
    %v120 = vpop.xlane.xlu0 %119
    %v121 = vsel %vm87, %v82, 0.0
    %122 = vadd.xlane.f32.xlu0 %v121
    %v123 = vpop.xlane.xlu0 %122
    %v124 = vsel %vm87, %v83, 0.0
    %125 = vadd.xlane.f32.xlu0 %v124
    %v126 = vpop.xlane.xlu0 %125
    %v127 = vsel %vm87, %v84, 0.0
    %128 = vadd.xlane.f32.xlu0 %v127
    %v129 = vpop.xlane.xlu0 %128
    %v130 = vsel %vm87, %v85, 0.0
    %131 = vadd.xlane.f32.xlu0 %v130
    %v132 = vpop.xlane.xlu0 %131
    %v133 = vsel %vm87, %v86, 0.0
    %134 = vadd.xlane.f32.xlu0 %v133
    %v135 = vpop.xlane.xlu0 %134
    %v136 = vld [vmem:[#allocation7] sm:$0x3]
    %v137 = vld [vmem:[#allocation5] sm:$0xff]
    %v138 = vld [vmem:[#allocation5 + $0x8] sm:$0xff]
    %v139 = vld [vmem:[#allocation5 + $0x10] sm:$0xff]
    %v140 = vld [vmem:[#allocation5 + $0x18] sm:$0xff]
    %v141 = vld [vmem:[#allocation5 + $0x20] sm:$0xff]
    %v142 = vld [vmem:[#allocation5 + $0x28] sm:$0xff]
    %v143 = vld [vmem:[#allocation5 + $0x30] sm:$0xff]
    %v144 = vld [vmem:[#allocation5 + $0x38] sm:$0xff]
    %v161 = vlaneseq
    %v162 = vand.u32 %v161, 127
    %v163 = vlaneseq
    %v164 = vshrl.u32 %v163, 7
    %v165 = vsub.s32 %v162, %v164
    %v166 = vrot.slane %v90, %v165
    %v167 = vadd.s32 %v162, 4294967288
    %v168 = vlaneseq
    %v169 = vshrl.u32 %v168, 7
    %v170 = vsub.s32 %v167, %v169
    %v171 = vrot.slane %v93, %v170
    %vm172 = vcmask 130112
    %v173 = vsel %vm172, %v171, %v166
    %v174 = vadd.s32 %v162, 4294967280
    %v175 = vlaneseq
    %v176 = vshrl.u32 %v175, 7
    %v177 = vsub.s32 %v174, %v176
    %v178 = vrot.slane %v96, %v177
    %vm179 = vcmask 195712
    %v180 = vsel %vm179, %v178, %v173
    %v181 = vadd.s32 %v162, 4294967272
    %v182 = vlaneseq
    %v183 = vshrl.u32 %v182, 7
    %v184 = vsub.s32 %v181, %v183
    %v185 = vrot.slane %v99, %v184
    %vm186 = vcmask 261312
    %v187 = vsel %vm186, %v185, %v180
    %v188 = vadd.s32 %v162, 4294967264
    %v189 = vlaneseq
    %v190 = vshrl.u32 %v189, 7
    %v191 = vsub.s32 %v188, %v190
    %v192 = vrot.slane %v102, %v191
    %vm193 = vcmask 326912
    %v194 = vsel %vm193, %v192, %v187
    %v195 = vadd.s32 %v162, 4294967256
    %v196 = vlaneseq
    %v197 = vshrl.u32 %v196, 7
    %v198 = vsub.s32 %v195, %v197
    %v199 = vrot.slane %v105, %v198
    %vm200 = vcmask 392512
    %v201 = vsel %vm200, %v199, %v194
    %v202 = vadd.s32 %v162, 4294967248
    %v203 = vlaneseq
    %v204 = vshrl.u32 %v203, 7
    %v205 = vsub.s32 %v202, %v204
    %v206 = vrot.slane %v108, %v205
    %vm207 = vcmask 458112
    %v208 = vsel %vm207, %v206, %v201
    %v209 = vadd.s32 %v162, 4294967240
    %v210 = vlaneseq
    %v211 = vshrl.u32 %v210, 7
    %v212 = vsub.s32 %v209, %v211
    %v213 = vrot.slane %v111, %v212
    %vm214 = vcmask 523712
    %v215 = vsel %vm214, %v213, %v208
    %v216 = vlaneseq
    %v217 = vshrl.u32 %v216, 7
    %v218 = vsub.s32 %v162, %v217
    %v219 = vrot.slane %v114, %v218
    %v220 = vlaneseq
    %v221 = vshrl.u32 %v220, 7
    %v222 = vsub.s32 %v167, %v221
    %v223 = vrot.slane %v117, %v222
    %v224 = vsel %vm172, %v223, %v219
    %v225 = vlaneseq
    %v226 = vshrl.u32 %v225, 7
    %v227 = vsub.s32 %v174, %v226
    %v228 = vrot.slane %v120, %v227
    %v229 = vsel %vm179, %v228, %v224
    %v230 = vlaneseq
    %v231 = vshrl.u32 %v230, 7
    %v232 = vsub.s32 %v181, %v231
    %v233 = vrot.slane %v123, %v232
    %v234 = vsel %vm186, %v233, %v229
    %v235 = vlaneseq
    %v236 = vshrl.u32 %v235, 7
    %v237 = vsub.s32 %v188, %v236
    %v238 = vrot.slane %v126, %v237
    %v239 = vsel %vm193, %v238, %v234
    %v240 = vlaneseq
    %v241 = vshrl.u32 %v240, 7
    %v242 = vsub.s32 %v195, %v241
    %v243 = vrot.slane %v129, %v242
    %v244 = vsel %vm200, %v243, %v239
    %v245 = vlaneseq
    %v246 = vshrl.u32 %v245, 7
    %v247 = vsub.s32 %v202, %v246
    %v248 = vrot.slane %v132, %v247
    %v249 = vsel %vm207, %v248, %v244
    %v250 = vlaneseq
    %v251 = vshrl.u32 %v250, 7
    %v252 = vsub.s32 %v209, %v251
    %v253 = vrot.slane %v135, %v252
    %v254 = vsel %vm214, %v253, %v249
    %vm255 = vcmask 1041409
    %v256 = vsel %vm255, %v254, %v215
    %v257 = vsel %vm87, %v256, 0
    %259 = vmatprep.subr.mxu0 0.0
    %260 = vmatpush1.msra.mxu0 %v137
    %261 = vmatprep.subr.mxu0 0.0
    %262 = vmatpush1.msra.mxu0 %v138
    %263 = vmatprep.subr.mxu0 0.0
    %264 = vmatpush1.msra.mxu0 %v139
    %265 = vmatprep.subr.mxu0 0.0
    %266 = vmatpush1.msra.mxu0 %v140
    %267 = vmatprep.subr.mxu0 0.0
    %268 = vmatpush1.msra.mxu0 %v141
    %269 = vmatprep.subr.mxu0 0.0
    %270 = vmatpush1.msra.mxu0 %v142
    %271 = vmatprep.subr.mxu0 0.0
    %272 = vmatpush1.msra.mxu0 %v143
    %273 = vmatprep.subr.mxu0 0.0
    %274 = vmatpush1.msra.mxu0 %v144
    %275 = vmatprep.subr.mxu0 0.0
    %276 = vmatpush1.msra.mxu0 0.0
    %277 = vmatprep.subr.mxu0 0.0
    %278 = vmatpush1.msra.mxu0 0.0
    %279 = vmatprep.subr.mxu0 0.0
    %280 = vmatpush1.msra.mxu0 0.0
    %281 = vmatprep.subr.mxu0 0.0
    %282 = vmatpush1.msra.mxu0 0.0
    %283 = vmatprep.subr.mxu0 0.0
    %284 = vmatpush1.msra.mxu0 0.0
    %285 = vmatprep.subr.mxu0 0.0
    %286 = vmatpush1.msra.mxu0 0.0
    %287 = vmatprep.subr.mxu0 0.0
    %288 = vmatpush1.msra.mxu0 0.0
    %289 = vmatprep.subr.mxu0 0.0
    %290 = vmatpush1.msra.mxu0 0.0
    %291 = vmatprep.subr.mxu0 0.0
    %292 = vmatpush1.msra.mxu0 0.0
    %293 = vmatprep.subr.mxu0 0.0
    %294 = vmatpush1.msra.mxu0 0.0
    %295 = vmatprep.subr.mxu0 0.0
    %296 = vmatpush1.msra.mxu0 0.0
    %297 = vmatprep.subr.mxu0 0.0
    %298 = vmatpush1.msra.mxu0 0.0
    %299 = vmatprep.subr.mxu0 0.0
    %300 = vmatpush1.msra.mxu0 0.0
    %301 = vmatprep.subr.mxu0 0.0
    %302 = vmatpush1.msra.mxu0 0.0
    %303 = vmatprep.subr.mxu0 0.0
    %304 = vmatpush1.msra.mxu0 0.0
    %305 = vmatprep.subr.mxu0 0.0
    %306 = vmatpush1.msra.mxu0 0.0
    %307 = vmatprep.subr.mxu0 0.0
    %308 = vmatpush1.msra.mxu0 0.0
    %309 = vmatprep.subr.mxu0 0.0
    %310 = vmatpush1.msra.mxu0 0.0
    %311 = vmatprep.subr.mxu0 0.0
    %312 = vmatpush1.msra.mxu0 0.0
    %313 = vmatprep.subr.mxu0 0.0
    %314 = vmatpush1.msra.mxu0 0.0
    %315 = vmatprep.subr.mxu0 0.0
    %316 = vmatpush1.msra.mxu0 0.0
    %317 = vmatprep.subr.mxu0 0.0
    %318 = vmatpush1.msra.mxu0 0.0
    %319 = vmatprep.subr.mxu0 0.0
    %320 = vmatpush1.msra.mxu0 0.0
    %321 = vmatprep.subr.mxu0 0.0
    %322 = vmatpush1.msra.mxu0 0.0
    %323 = vmatprep.mubr.f32.mxu0 0.0
    %324 = vmatmul.mubr.f32.gmra.mrb[0].mxu0 %v257
    %v325 = vpop.f32.mrb[0].mxu0
    %v326 = vadd.f32 0.0, %v325
    %v327 = vpop.f32.mrb[0].mxu0
    %328 = vdwg.mxu0
    %v329 = vadd.f32 %v136, %v326
    %330 = vst [vmem:[#allocation7] sm:$0x3] %v329
    // Predicated region
    $region26: #{tpu_custom_call.1} parent=1 // pred_check
      _
    $region27: #{tpu_custom_call.1} parent=1 // pred_check_branch
      %332 = sbr.rel (0) target = $region29
    $region28: #{tpu_custom_call.1} parent=1 // pred_region
      %s334 = ssub.s32 32, 32
      %335 = vsyncadd [#allocation4], %s334
      %s337 = sshll.u32 [#allocation7], 4
      %s338 = int_to_ptr.vmem [resolvable:$true] %s337
      %340 = dma.vmem_to_hbm [thread:$0]  %s338, 32, %s3, [#allocation4]
    $region29: #{tpu_custom_call.1} parent=1 // pred_fallthru
      _
    // Predicated region
    $region30: #{tpu_custom_call.1} parent=1 // pred_check
      _
    $region31: #{tpu_custom_call.1} parent=1 // pred_check_branch
      %342 = sbr.rel (0) target = $region33
    $region32: #{tpu_custom_call.1} parent=1 // pred_region
      %343 = dma.done [#allocation4], 32
    $region33: #{tpu_custom_call.1} parent=1 // pred_fallthru
      _
    %344 = vsyncpa [#allocation3], 1
    %345 = vsyncpa [#allocation6], 1
    %346 = vsyncpa [#allocation4], 1

</llo_original>
